<compile_context>
chip_gen: v7x
topology: tpu7x:2x2x1
jax: 0.10.0
libtpu: 0.0.40
codegen_flags: <defaults>
</compile_context>

<pallas_src>
import jax
import jax.numpy as jnp
from jax.experimental import pallas as pl
from jax.experimental.pallas import tpu as pltpu

_SUBLANE = 8
_LANE = 128
_F32 = jnp.dtype(jnp.float32).itemsize


def _round_up(x, m):
    return ((x + m - 1) // m) * m


def _cdiv(a, b):
    return (a + b - 1) // b


def _vmem_tile_bytes(rows, cols):
    """VMEM footprint of one f32 tile, accounting for (8, 128) layout padding."""
    return _round_up(max(rows, 1), _SUBLANE) * _round_up(max(cols, 1), _LANE) * _F32


# ---------------------------------------------------------------------------
# Kernels
# ---------------------------------------------------------------------------
def _linear_kernel_resident(x_ref, w_ref, b_ref, o_ref):
    # Whole reduction (K) resident: one MXU matmul per M tile, bias fused,
    # single store of the output tile.
    o_ref[...] = (
        jnp.dot(x_ref[...], w_ref[...], preferred_element_type=jnp.float32)
        + b_ref[...]
    ).astype(o_ref.dtype)


def _linear_kernel_streamk(x_ref, w_ref, b_ref, o_ref):
    # K is the last (reduction) grid axis.  Accumulate directly into the f32
    # output tile (no scratch); initialize it with the bias at k == 0.
    k = pl.program_id(1)

    @pl.when(k == 0)
    def _():
        o_ref[...] = jnp.broadcast_to(b_ref[...], o_ref.shape).astype(o_ref.dtype)

    o_ref[...] += jnp.dot(
        x_ref[...], w_ref[...], preferred_element_type=jnp.float32
    )


# ---------------------------------------------------------------------------
# Wrapper
# ---------------------------------------------------------------------------
def logistic_regression_forward(x, weight, bias, *, tile_m=None, tile_k=None):
    """out = x @ weight + bias  (nn.Linear forward with pre-transposed weight).

    x:      [M, K] float32
    weight: [K, N] float32   (PyTorch weight [N, K] transposed)
    bias:   [N]    float32
    returns [M, N] float32
    """
    M, K = x.shape
    Kw, N = weight.shape
    assert K == Kw, (K, Kw)
    assert bias.shape == (N,), bias.shape

    # ---- generation-aware VMEM budget (~48 MiB on v7x, ~96 MiB on v5e/v6e)
    try:
        vmem_cap = int(pltpu.get_tpu_info().vmem_capacity_bytes)
    except Exception:
        vmem_cap = 64 * 1024 * 1024
    vmem_cap = max(vmem_cap, 32 * 1024 * 1024)
    budget = vmem_cap * 3 // 4

    def resident_vmem(tm):
        return (2 * _vmem_tile_bytes(tm, K)      # x tile, double-buffered
                + _vmem_tile_bytes(K, N)         # weight, single-buffered
                + _vmem_tile_bytes(1, N)         # bias, single-buffered
                + 2 * _vmem_tile_bytes(tm, N))   # output tile, double-buffered

    def streamed_vmem(tm, tk):
        return (2 * _vmem_tile_bytes(tm, tk)
                + 2 * _vmem_tile_bytes(tk, N)
                + _vmem_tile_bytes(1, N)
                + 2 * _vmem_tile_bytes(tm, N))

    # ---- tiling selection ------------------------------------------------
    m_cap = _round_up(M, _SUBLANE)
    if tile_m is None or tile_k is None:
        sel_m, sel_k = None, None
        # Prefer keeping the whole reduction resident: weight DMA'd once,
        # x streamed exactly once, no K grid axis, no accumulator scratch.
        for tm in (1024, 512, 256, 128, 64, 32, 16, 8):
            tm_eff = min(tm, m_cap)
            if resident_vmem(tm_eff) <= budget:
                sel_m, sel_k = tm_eff, K
                break
        if sel_m is None:
            # Huge K (or N): stream K through the grid instead.
            for tm in (512, 256, 128, 64, 32, 16, 8):
                tm_eff = min(tm, m_cap)
                for tk in (2048, 1024, 512, 256, 128):
                    if streamed_vmem(tm_eff, tk) <= budget:
                        sel_m, sel_k = tm_eff, tk
                        break
                if sel_m is not None:
                    break
        if sel_m is None:  # pathological shapes; best effort
            sel_m, sel_k = min(8, m_cap), _LANE
        if tile_m is None:
            tile_m = sel_m
        if tile_k is None:
            tile_k = sel_k

    # v7x megacore: keep at least two M blocks so the "parallel" axis can be
    # sharded across both TensorCores (harmless on single-TC v5e/v6e).
    if M >= 2 * _SUBLANE:
        tile_m = min(tile_m, _round_up(_cdiv(M, 2), _SUBLANE))
    # Legality: second-to-last block dim must be a multiple of 8 or the full dim.
    if tile_m % _SUBLANE != 0:
        tile_m = _round_up(tile_m, _SUBLANE)
    if tile_m > M:
        tile_m = M                      # full-dim block is always legal
    tile_m = max(int(tile_m), 1)

    resident = tile_k >= K
    if resident:
        tile_k = K
        K_pad = K
        num_k = 1
    else:
        tile_k = max(_LANE, _round_up(int(tile_k), _LANE))
        K_pad = _round_up(K, tile_k)
        num_k = K_pad // tile_k

    num_m = _cdiv(M, tile_m)

    # ---- inputs (only the K remainder is ever zero-padded) ---------------
    if K_pad != K:
        # Zero rows/cols contribute nothing to the dot product.  M and N are
        # never padded: out-of-range rows of the last M block are clipped on
        # store by the Pallas pipeline.
        x_in = jnp.pad(x, ((0, 0), (0, K_pad - K)))
        w_in = jnp.pad(weight, ((0, K_pad - K), (0, 0)))
    else:
        x_in, w_in = x, weight
    b_in = bias.reshape(1, N)

    # ---- block specs / kernel selection -----------------------------------
    if resident:
        grid = (num_m,)
        in_specs = [
            pl.BlockSpec((tile_m, K), lambda i: (i, 0)),
            pl.BlockSpec((K, N), lambda i: (0, 0), pipeline_mode=pl.Buffered(1)),
            pl.BlockSpec((1, N), lambda i: (0, 0), pipeline_mode=pl.Buffered(1)),
        ]
        out_spec = pl.BlockSpec((tile_m, N), lambda i: (i, 0))
        kernel = _linear_kernel_resident
        dim_sem = ("parallel",)
        vmem_need = resident_vmem(tile_m)
        w_hbm_reads = 1
    else:
        grid = (num_m, num_k)
        in_specs = [
            pl.BlockSpec((tile_m, tile_k), lambda i, k: (i, k)),
            pl.BlockSpec((tile_k, N), lambda i, k: (k, 0)),
            pl.BlockSpec((1, N), lambda i, k: (0, 0), pipeline_mode=pl.Buffered(1)),
        ]
        out_spec = pl.BlockSpec((tile_m, N), lambda i, k: (i, 0))
        kernel = _linear_kernel_streamk
        dim_sem = ("parallel", "arbitrary")
        vmem_need = streamed_vmem(tile_m, tile_k)
        w_hbm_reads = num_m  # weight is re-streamed once per M tile

    vmem_limit = int(
        max(min(budget, 2 * vmem_need), vmem_need * 5 // 4, 8 * 1024 * 1024)
    )

    cost = pl.CostEstimate(
        flops=2 * M * K_pad * N,
        transcendentals=0,
        bytes_accessed=(M * K_pad + w_hbm_reads * K_pad * N + N + M * N) * _F32,
    )

    return pl.pallas_call(
        kernel,
        out_shape=jax.ShapeDtypeStruct((M, N), jnp.float32),
        grid_spec=pltpu.PrefetchScalarGridSpec(
            num_scalar_prefetch=0,
            grid=grid,
            in_specs=in_specs,
            out_specs=out_spec,
        ),
        compiler_params=pltpu.CompilerParams(
            dimension_semantics=dim_sem,
            vmem_limit_bytes=vmem_limit,
        ),
        cost_estimate=cost,
    )(x_in, w_in, b_in)


# ---------------------------------------------------------------------------
# Demo / self-check
# ---------------------------------------------------------------------------
if __name__ == "__main__":
    key = jax.random.PRNGKey(0)

    # --- main check: small LogisticRegression-shaped problem (resident path)
    batch, input_dim, output_dim = 8, 32, 8
    kx, kw, kb, k2x, k2w, k2b = jax.random.split(key, 6)

    x = jax.random.normal(kx, (batch, input_dim), dtype=jnp.float32)
    bound = 1.0 / jnp.sqrt(jnp.float32(input_dim))
    w_torch = jax.random.uniform(
        kw, (output_dim, input_dim), dtype=jnp.float32, minval=-bound, maxval=bound
    )
    bias = jax.random.uniform(
        kb, (output_dim,), dtype=jnp.float32, minval=-bound, maxval=bound
    )
    weight = w_torch.T  # [input_dim, output_dim]

    out = jax.block_until_ready(logistic_regression_forward(x, weight, bias))
    ref = x @ weight + bias
    assert out.shape == (batch, output_dim), out.shape
    assert jnp.allclose(out, ref, atol=1e-5, rtol=1e-5)

    # --- secondary check: unaligned M/N + streamed-K fallback path ---------
    M2, K2, N2 = 10, 200, 5
    x2 = jax.random.normal(k2x, (M2, K2), dtype=jnp.float32)
    b2_bound = 1.0 / jnp.sqrt(jnp.float32(K2))
    w2 = jax.random.uniform(
        k2w, (K2, N2), dtype=jnp.float32, minval=-b2_bound, maxval=b2_bound
    )
    b2 = jax.random.uniform(
        k2b, (N2,), dtype=jnp.float32, minval=-b2_bound, maxval=b2_bound
    )
    out2 = jax.block_until_ready(
        logistic_regression_forward(x2, w2, b2, tile_m=8, tile_k=128)
    )
    ref2 = x2 @ w2 + b2
    assert out2.shape == (M2, N2), out2.shape
    assert jnp.allclose(out2, ref2, atol=1e-4, rtol=1e-4)

    print("KERNEL_OK")
</pallas_src>

<mosaic_0001>
module attributes {stable_mosaic.version = 11 : i64} {
  func.func @_linear_kernel_resident(%arg0: i32, %arg1: memref<8x32xf32, #tpu.memory_space<vmem>>, %arg2: memref<32x8xf32, #tpu.memory_space<vmem>>, %arg3: memref<1x8xf32, #tpu.memory_space<vmem>>, %arg4: memref<8x8xf32, #tpu.memory_space<vmem>>) attributes {dimension_semantics = [#tpu.dimension_semantics<parallel>], iteration_bounds = array<i64: 1>, scalar_prefetch = 0 : i64, scratch_operands = 0 : i64, tpu.core_type = #tpu.core_type<tc>, window_params = [{transform_indices = @transform_0, window_bounds = array<i64: 8, 32>}, {pipeline_mode = #tpu.pipeline_mode<synchronous>, transform_indices = @transform_1, window_bounds = array<i64: 32, 8>}, {pipeline_mode = #tpu.pipeline_mode<synchronous>, transform_indices = @transform_2, window_bounds = array<i64: 1, 8>}, {transform_indices = @transform_3, window_bounds = array<i64: 8, 8>}]} {
    %c0 = arith.constant 0 : index
    %c0_0 = arith.constant 0 : index
    %0 = vector.load %arg1[%c0, %c0_0] : memref<8x32xf32, #tpu.memory_space<vmem>>, vector<8x32xf32>
    %c0_1 = arith.constant 0 : index
    %c0_2 = arith.constant 0 : index
    %1 = vector.load %arg2[%c0_1, %c0_2] : memref<32x8xf32, #tpu.memory_space<vmem>>, vector<32x8xf32>
    %cst = arith.constant dense<0.000000e+00> : vector<8x8xf32>
    %2 = tpu.matmul %0, %1, %cst {dimension_numbers = #tpu.dot_dimension_numbers<[1], [0], [0], [1], [0, 0, 1, 1], [], []>} : vector<8x32xf32>, vector<32x8xf32>, vector<8x8xf32> -> vector<8x8xf32>
    %c0_3 = arith.constant 0 : index
    %c0_4 = arith.constant 0 : index
    %3 = vector.load %arg3[%c0_3, %c0_4] : memref<1x8xf32, #tpu.memory_space<vmem>>, vector<1x8xf32>
    %4 = vector.broadcast %3 : vector<1x8xf32> to vector<8x8xf32>
    %5 = arith.addf %2, %4 : vector<8x8xf32>
    %c0_5 = arith.constant 0 : index
    %c0_6 = arith.constant 0 : index
    %6 = vector.load %arg4[%c0_5, %c0_6] : memref<8x8xf32, #tpu.memory_space<vmem>>, vector<8x8xf32>
    tpu.vector_store %arg4[%c0_5, %c0_6], %5 {strides = array<i32>} : memref<8x8xf32, #tpu.memory_space<vmem>>, vector<8x8xf32>,
    return
  }
  func.func @transform_0(%arg0: i32) -> (i32, i32) {
    %c0_i32 = arith.constant 0 : i32
    %c0_i32_0 = arith.constant 0 : i32
    return %arg0, %c0_i32 : i32, i32
  }
  func.func @transform_1(%arg0: i32) -> (i32, i32) {
    %c0_i32 = arith.constant 0 : i32
    %c0_i32_0 = arith.constant 0 : i32
    %c0_i32_1 = arith.constant 0 : i32
    return %c0_i32, %c0_i32_0 : i32, i32
  }
  func.func @transform_2(%arg0: i32) -> (i32, i32) {
    %c0_i32 = arith.constant 0 : i32
    %c0_i32_0 = arith.constant 0 : i32
    %c0_i32_1 = arith.constant 0 : i32
    return %c0_i32, %c0_i32_0 : i32, i32
  }
  func.func @transform_3(%arg0: i32) -> (i32, i32) {
    %c0_i32 = arith.constant 0 : i32
    %c0_i32_0 = arith.constant 0 : i32
    return %arg0, %c0_i32 : i32, i32
  }
}

</mosaic_0001>

<llo_original>
// kernel: tpu_custom_call.1
$region0: #{tpu_custom_call.1}
  #allocation0 [shape = 'u32[]', space=smem, size = 0x4, offset = 0x4, fixed_abs, tag = 'smem constant byte address 0x4 - core index']
  #allocation1 [shape = 'u32[144,128]{1,0:T(1,128)}', space=vmem, size = 0x12000, scoped, tag = 'internal scratch']
  %s0 = inlined_call_operand.vmem [shape: f32[8,32], index: 0, kind: input, shape index: {}]
  %s1 = inlined_call_operand.vmem [shape: f32[32,8], index: 1, kind: input, shape index: {}]
  %s2 = inlined_call_operand.vmem [shape: f32[1,8], index: 2, kind: input, shape index: {}]
  %s3 = inlined_call_operand.hbm [shape: f32[8,8], index: 3, kind: output, shape index: {}]
  %s4 = sld [smem:[#allocation0]]
  $region22: #{tpu_custom_call.1} parent=0
    _
  %s6 = ssub.s32 1, %s4
  %s7 = scalar_select 0, %s6, %s4
  $region1: #{tpu_custom_call.1} parent=0
    #allocation2 [shape = 'u8[4096]{0}', space=vmem, size = 0x1000, scoped, tag = 'output window, operand 0, single buffered']
    #allocation3 [shape = 's32[1]{0}', space=sflag, size = 0x4, scoped, tag = 'scoped memory for tpu_custom_call.1']
    %8 = vsyncpa [#allocation3], 0
    // Predicated region
    $region2: #{tpu_custom_call.1} parent=1 // pred_check
      _
    $region3: #{tpu_custom_call.1} parent=1 // pred_check_branch
      %10 = sbr.rel (0) target = $region5
    $region4: #{tpu_custom_call.1} parent=1 // pred_region
      _
    $region5: #{tpu_custom_call.1} parent=1 // pred_fallthru
      _
    // Predicated region
    $region6: #{tpu_custom_call.1} parent=1 // pred_check
      _
    $region7: #{tpu_custom_call.1} parent=1 // pred_check_branch
      %12 = sbr.rel (0) target = $region9
    $region8: #{tpu_custom_call.1} parent=1 // pred_region
      _
    $region9: #{tpu_custom_call.1} parent=1 // pred_fallthru
      _
    // Predicated region
    $region10: #{tpu_custom_call.1} parent=1 // pred_check
      _
    $region11: #{tpu_custom_call.1} parent=1 // pred_check_branch
      %14 = sbr.rel (0) target = $region13
    $region12: #{tpu_custom_call.1} parent=1 // pred_region
      _
    $region13: #{tpu_custom_call.1} parent=1 // pred_fallthru
      _
    %v15 = vld [vmem:[%s0] sm:$0xff]
    %v16 = vld [vmem:[%s1] sm:$0xff]
    %v17 = vld [vmem:[%s1 + $0x8] sm:$0xff]
    %v18 = vld [vmem:[%s1 + $0x10] sm:$0xff]
    %v19 = vld [vmem:[%s1 + $0x18] sm:$0xff]
    %v20 = vld [vmem:[%s2] sm:$0x1]
    %v22 = vlaneseq
    %v23 = vshrl.u32 %v22, 7
    %v24 = vsub.s32 0, %v23
    %v25 = vrot.slane %v20, %v24
    %vm27 = vcmask 261120
    %v29 = vsel %vm27, %v15, 0
    %31 = vmatprep.subr.mxu0 0.0
    %32 = vmatpush1.msra.mxu0 %v16
    %33 = vmatprep.subr.mxu0 0.0
    %34 = vmatpush1.msra.mxu0 %v17
    %35 = vmatprep.subr.mxu0 0.0
    %36 = vmatpush1.msra.mxu0 %v18
    %37 = vmatprep.subr.mxu0 0.0
    %38 = vmatpush1.msra.mxu0 %v19
    %39 = vmatprep.subr.mxu0 0.0
    %40 = vmatpush1.msra.mxu0 0.0
    %41 = vmatprep.subr.mxu0 0.0
    %42 = vmatpush1.msra.mxu0 0.0
    %43 = vmatprep.subr.mxu0 0.0
    %44 = vmatpush1.msra.mxu0 0.0
    %45 = vmatprep.subr.mxu0 0.0
    %46 = vmatpush1.msra.mxu0 0.0
    %47 = vmatprep.subr.mxu0 0.0
    %48 = vmatpush1.msra.mxu0 0.0
    %49 = vmatprep.subr.mxu0 0.0
    %50 = vmatpush1.msra.mxu0 0.0
    %51 = vmatprep.subr.mxu0 0.0
    %52 = vmatpush1.msra.mxu0 0.0
    %53 = vmatprep.subr.mxu0 0.0
    %54 = vmatpush1.msra.mxu0 0.0
    %55 = vmatprep.subr.mxu0 0.0
    %56 = vmatpush1.msra.mxu0 0.0
    %57 = vmatprep.subr.mxu0 0.0
    %58 = vmatpush1.msra.mxu0 0.0
    %59 = vmatprep.subr.mxu0 0.0
    %60 = vmatpush1.msra.mxu0 0.0
    %61 = vmatprep.subr.mxu0 0.0
    %62 = vmatpush1.msra.mxu0 0.0
    %63 = vmatprep.subr.mxu0 0.0
    %64 = vmatpush1.msra.mxu0 0.0
    %65 = vmatprep.subr.mxu0 0.0
    %66 = vmatpush1.msra.mxu0 0.0
    %67 = vmatprep.subr.mxu0 0.0
    %68 = vmatpush1.msra.mxu0 0.0
    %69 = vmatprep.subr.mxu0 0.0
    %70 = vmatpush1.msra.mxu0 0.0
    %71 = vmatprep.subr.mxu0 0.0
    %72 = vmatpush1.msra.mxu0 0.0
    %73 = vmatprep.subr.mxu0 0.0
    %74 = vmatpush1.msra.mxu0 0.0
    %75 = vmatprep.subr.mxu0 0.0
    %76 = vmatpush1.msra.mxu0 0.0
    %77 = vmatprep.subr.mxu0 0.0
    %78 = vmatpush1.msra.mxu0 0.0
    %79 = vmatprep.subr.mxu0 0.0
    %80 = vmatpush1.msra.mxu0 0.0
    %81 = vmatprep.subr.mxu0 0.0
    %82 = vmatpush1.msra.mxu0 0.0
    %83 = vmatprep.subr.mxu0 0.0
    %84 = vmatpush1.msra.mxu0 0.0
    %85 = vmatprep.subr.mxu0 0.0
    %86 = vmatpush1.msra.mxu0 0.0
    %87 = vmatprep.subr.mxu0 0.0
    %88 = vmatpush1.msra.mxu0 0.0
    %89 = vmatprep.subr.mxu0 0.0
    %90 = vmatpush1.msra.mxu0 0.0
    %91 = vmatprep.subr.mxu0 0.0
    %92 = vmatpush1.msra.mxu0 0.0
    %93 = vmatprep.subr.mxu0 0.0
    %94 = vmatpush1.msra.mxu0 0.0
    %95 = vmatprep.mubr.f32.mxu0 0.0
    %96 = vmatmul.mubr.f32.gmra.mrb[0].mxu0 %v29
    %v97 = vpop.f32.mrb[0].mxu0
    %v98 = vadd.f32 %v25, %v97
    %v99 = vpop.f32.mrb[0].mxu0
    %100 = vdwg.mxu0
    %vm101 = vcmask 64512
    %102 = vst.msk [vmem:[#allocation2] sm:$0xff] %vm101, %v98
    // Predicated region
    $region14: #{tpu_custom_call.1} parent=1 // pred_check
      _
    $region15: #{tpu_custom_call.1} parent=1 // pred_check_branch
      %104 = sbr.rel (0) target = $region17
    $region16: #{tpu_custom_call.1} parent=1 // pred_region
      %s106 = ssub.s32 128, 128
      %107 = vsyncadd [#allocation3], %s106
      %s109 = sshll.u32 [#allocation2], 4
      %s110 = int_to_ptr.vmem [resolvable:$true] %s109
      %112 = dma.vmem_to_hbm [thread:$0]  %s110, 128, %s3, [#allocation3]
    $region17: #{tpu_custom_call.1} parent=1 // pred_fallthru
      _
    // Predicated region
    $region18: #{tpu_custom_call.1} parent=1 // pred_check
      _
    $region19: #{tpu_custom_call.1} parent=1 // pred_check_branch
      %114 = sbr.rel (0) target = $region21
    $region20: #{tpu_custom_call.1} parent=1 // pred_region
      %115 = dma.done [#allocation3], 128
    $region21: #{tpu_custom_call.1} parent=1 // pred_fallthru
      _
    %116 = vsyncpa [#allocation3], 1

</llo_original>
